<compile_context>
chip_gen: v5e
topology: v5e:2x2
jax: 0.10.0
libtpu: 0.0.40
codegen_flags: <defaults>
</compile_context>

<pallas_src>
import functools

import jax
import jax.numpy as jnp
from jax.experimental import pallas as pl
from jax.experimental.pallas import tpu as pltpu


def _round_up(x, m):
    return ((x + m - 1) // m) * m


def _dice_partial_kernel(n_valid, tile_n, tiles_per_split,
                         logits_ref, targets_ref,
                         inter_ref, union_ref,
                         inter_acc, union_acc):
    s = pl.program_id(0)          # parallel split (uses both TCs on v7x)
    k = pl.program_id(1)          # reduction over feature tiles
    num_k = pl.num_programs(1)

    @pl.when(k == 0)
    def _init():
        inter_acc[...] = jnp.zeros_like(inter_acc)
        union_acc[...] = jnp.zeros_like(union_acc)

    # Mask ragged / fully out-of-range columns instead of padding in HBM.
    col0 = (s * tiles_per_split + k) * tile_n
    col = col0 + jax.lax.broadcasted_iota(jnp.int32, logits_ref.shape, 1)
    valid = col < n_valid

    p = jax.nn.sigmoid(logits_ref[...].astype(jnp.float32))
    t = targets_ref[...].astype(jnp.float32)
    p = jnp.where(valid, p, 0.0)
    t = jnp.where(valid, t, 0.0)

    inter_acc[...] += jnp.sum(p * t, axis=1, keepdims=True)
    union_acc[...] += jnp.sum(p + t, axis=1, keepdims=True)

    @pl.when(k == num_k - 1)
    def _finalize():
        inter_ref[0] = inter_acc[...]
        union_ref[0] = union_acc[...]


def dice_loss(logits, targets, smooth=1e-6, tile_n=None):
    assert logits.shape == targets.shape
    b = logits.shape[0]
    logits2 = logits.reshape(b, -1)      # metadata-only reshape, no HBM copy
    targets2 = targets.reshape(b, -1)
    n = logits2.shape[1]

    b_pad = _round_up(b, 8)
    if tile_n is None:
        # 2 inputs x 2 pipeline buffers x pad8(B) x tile_n x 4B  <= ~12 MiB
        budget_bytes = 12 * 1024 * 1024
        by_budget = budget_bytes // (4 * b_pad * 4)
        tile_n = max(512, min(16384, (by_budget // 128) * 128))
    tile_n = min(tile_n, _round_up(n, 128))
    tile_n = max(128, (tile_n // 128) * 128)

    num_tiles = pl.cdiv(n, tile_n)
    n_splits = 2 if num_tiles >= 2 else 1       # 2-way split for 2-TC chips
    tiles_per_split = pl.cdiv(num_tiles, n_splits)
    last_block = num_tiles - 1

    def in_map(s, k):
        # Clamp tiles past the end (ragged split); they're fully masked
        # in-kernel via the column iota so they contribute nothing.
        return (0, jnp.minimum(s * tiles_per_split + k, last_block))

    kernel = functools.partial(
        _dice_partial_kernel, int(n), int(tile_n), int(tiles_per_split))

    inter_p, union_p = pl.pallas_call(
        kernel,
        out_shape=(jax.ShapeDtypeStruct((n_splits, b, 1), jnp.float32),
                   jax.ShapeDtypeStruct((n_splits, b, 1), jnp.float32)),
        grid_spec=pltpu.PrefetchScalarGridSpec(
            num_scalar_prefetch=0,
            grid=(n_splits, tiles_per_split),
            in_specs=[
                pl.BlockSpec((b, tile_n), in_map),
                pl.BlockSpec((b, tile_n), in_map),
            ],
            out_specs=[
                pl.BlockSpec((1, b, 1), lambda s, k: (s, 0, 0)),
                pl.BlockSpec((1, b, 1), lambda s, k: (s, 0, 0)),
            ],
            scratch_shapes=[
                pltpu.VMEM((b, 1), jnp.float32),  # intersection accumulator
                pltpu.VMEM((b, 1), jnp.float32),  # union accumulator
            ],
        ),
        compiler_params=pltpu.CompilerParams(
            dimension_semantics=("parallel", "arbitrary"),
            vmem_limit_bytes=32 * 1024 * 1024,
        ),
    )(logits2, targets2)

    # Tiny epilogue in JAX: combine per-split partial sums, then dice/mean.
    inter = jnp.sum(inter_p, axis=0)[:, 0]
    union = jnp.sum(union_p, axis=0)[:, 0]
    dice = (2.0 * inter + smooth) / (union + smooth)
    return 1.0 - jnp.mean(dice)


def dice_loss_ref(logits, targets, smooth=1e-6):
    b = logits.shape[0]
    probs = jax.nn.sigmoid(logits).reshape(b, -1)
    t = targets.reshape(b, -1)
    inter = jnp.sum(probs * t, axis=1)
    union = jnp.sum(probs, axis=1) + jnp.sum(t, axis=1)
    dice = (2.0 * inter + smooth) / (union + smooth)
    return 1.0 - jnp.mean(dice)


if __name__ == "__main__":
    key = jax.random.PRNGKey(0)
    k1, k2 = jax.random.split(key)

    B, C, H, W = 2, 4, 16, 16  # NCHW, matching typical segmentation logits
    logits = jax.random.normal(k1, (B, C, H, W), dtype=jnp.float32)
    targets = (jax.random.uniform(k2, (B, C, H, W)) > 0.5).astype(jnp.float32)

    out = dice_loss(logits, targets)
    out = jax.block_until_ready(out)

    ref = dice_loss_ref(logits, targets)
    assert jnp.allclose(out, ref, atol=1e-5, rtol=1e-5), (out, ref)

    print("KERNEL_OK")
</pallas_src>

<mosaic_0001>
module attributes {stable_mosaic.version = 11 : i64} {
  func.func @_dice_partial_kernel(%arg0: i32, %arg1: i32, %arg2: memref<2x1024xf32, #tpu.memory_space<vmem>>, %arg3: memref<2x1024xf32, #tpu.memory_space<vmem>>, %arg4: memref<1x2x1xf32, #tpu.memory_space<vmem>>, %arg5: memref<1x2x1xf32, #tpu.memory_space<vmem>>, %arg6: memref<2x1xf32, #tpu.memory_space<vmem>>, %arg7: memref<2x1xf32, #tpu.memory_space<vmem>>) attributes {dimension_semantics = [#tpu.dimension_semantics<parallel>, #tpu.dimension_semantics<arbitrary>], iteration_bounds = array<i64: 1, 1>, scalar_prefetch = 0 : i64, scratch_operands = 2 : i64, tpu.core_type = #tpu.core_type<tc>, window_params = [{transform_indices = @transform_0, window_bounds = array<i64: 2, 1024>}, {transform_indices = @transform_1, window_bounds = array<i64: 2, 1024>}, {transform_indices = @transform_2, window_bounds = array<i64: 1, 2, 1>}, {transform_indices = @transform_3, window_bounds = array<i64: 1, 2, 1>}]} {
    %c0_i32 = arith.constant 0 : i32
    %0 = arith.cmpi eq, %arg1, %c0_i32 : i32
    %1 = arith.extui %0 : i1 to i32
    %c0_i32_0 = arith.constant 0 : i32
    %2 = arith.cmpi ne, %1, %c0_i32_0 : i32
    scf.if %2 {
      %cst_19 = arith.constant 0.000000e+00 : f32
      %37 = vector.broadcast %cst_19 : f32 to vector<2x1xf32>
      %c0_20 = arith.constant 0 : index
      %c0_21 = arith.constant 0 : index
      %38 = vector.load %arg6[%c0_20, %c0_21] : memref<2x1xf32, #tpu.memory_space<vmem>>, vector<2x1xf32>
      tpu.vector_store %arg6[%c0_20, %c0_21], %37 {strides = array<i32>} : memref<2x1xf32, #tpu.memory_space<vmem>>, vector<2x1xf32>,
      %cst_22 = arith.constant 0.000000e+00 : f32
      %39 = vector.broadcast %cst_22 : f32 to vector<2x1xf32>
      %c0_23 = arith.constant 0 : index
      %c0_24 = arith.constant 0 : index
      %40 = vector.load %arg7[%c0_23, %c0_24] : memref<2x1xf32, #tpu.memory_space<vmem>>, vector<2x1xf32>
      tpu.vector_store %arg7[%c0_23, %c0_24], %39 {strides = array<i32>} : memref<2x1xf32, #tpu.memory_space<vmem>>, vector<2x1xf32>,
    } else {
    }
    %c1_i32 = arith.constant 1 : i32
    %3 = arith.muli %arg0, %c1_i32 : i32
    %4 = arith.addi %3, %arg1 : i32
    %c1024_i32 = arith.constant 1024 : i32
    %5 = arith.muli %4, %c1024_i32 : i32
    %6 = tpu.iota {dimensions = array<i32: 1>} : vector<2x1024xi32>
    %7 = vector.broadcast %5 : i32 to vector<2x1024xi32>
    %8 = arith.addi %7, %6 : vector<2x1024xi32>
    %c1024_i32_1 = arith.constant 1024 : i32
    %9 = vector.broadcast %c1024_i32_1 : i32 to vector<2x1024xi32>
    %10 = arith.cmpi slt, %8, %9 : vector<2x1024xi32>
    %c0 = arith.constant 0 : index
    %c0_2 = arith.constant 0 : index
    %11 = vector.load %arg2[%c0, %c0_2] : memref<2x1024xf32, #tpu.memory_space<vmem>>, vector<2x1024xf32>
    %12 = arith.negf %11 : vector<2x1024xf32>
    %13 = math.exp %12 : vector<2x1024xf32>
    %cst = arith.constant 1.000000e+00 : f32
    %14 = vector.broadcast %cst : f32 to vector<2x1024xf32>
    %15 = arith.addf %14, %13 : vector<2x1024xf32>
    %16 = arith.divf %14, %15 : vector<2x1024xf32>
    %c0_3 = arith.constant 0 : index
    %c0_4 = arith.constant 0 : index
    %17 = vector.load %arg3[%c0_3, %c0_4] : memref<2x1024xf32, #tpu.memory_space<vmem>>, vector<2x1024xf32>
    %cst_5 = arith.constant 0.000000e+00 : f32
    %18 = vector.broadcast %cst_5 : f32 to vector<2x1024xf32>
    %19 = arith.select %10, %16, %18 : vector<2x1024xi1>, vector<2x1024xf32>
    %cst_6 = arith.constant 0.000000e+00 : f32
    %20 = vector.broadcast %cst_6 : f32 to vector<2x1024xf32>
    %21 = arith.select %10, %17, %20 : vector<2x1024xi1>, vector<2x1024xf32>
    %c0_7 = arith.constant 0 : index
    %c0_8 = arith.constant 0 : index
    %22 = vector.load %arg6[%c0_7, %c0_8] : memref<2x1xf32, #tpu.memory_space<vmem>>, vector<2x1xf32>
    %23 = arith.mulf %19, %21 : vector<2x1024xf32>
    %cst_9 = arith.constant dense<0.000000e+00> : vector<2xf32>
    %24 = vector.multi_reduction <add>, %23, %cst_9 [1] : vector<2x1024xf32> to vector<2xf32>
    %25 = vector.shape_cast %24 : vector<2xf32> to vector<2x1xf32>
    %26 = arith.addf %22, %25 : vector<2x1xf32>
    %c0_10 = arith.constant 0 : index
    %c0_11 = arith.constant 0 : index
    %27 = vector.load %arg6[%c0_10, %c0_11] : memref<2x1xf32, #tpu.memory_space<vmem>>, vector<2x1xf32>
    tpu.vector_store %arg6[%c0_10, %c0_11], %26 {strides = array<i32>} : memref<2x1xf32, #tpu.memory_space<vmem>>, vector<2x1xf32>,
    %c0_12 = arith.constant 0 : index
    %c0_13 = arith.constant 0 : index
    %28 = vector.load %arg7[%c0_12, %c0_13] : memref<2x1xf32, #tpu.memory_space<vmem>>, vector<2x1xf32>
    %29 = arith.addf %19, %21 : vector<2x1024xf32>
    %cst_14 = arith.constant dense<0.000000e+00> : vector<2xf32>
    %30 = vector.multi_reduction <add>, %29, %cst_14 [1] : vector<2x1024xf32> to vector<2xf32>
    %31 = vector.shape_cast %30 : vector<2xf32> to vector<2x1xf32>
    %32 = arith.addf %28, %31 : vector<2x1xf32>
    %c0_15 = arith.constant 0 : index
    %c0_16 = arith.constant 0 : index
    %33 = vector.load %arg7[%c0_15, %c0_16] : memref<2x1xf32, #tpu.memory_space<vmem>>, vector<2x1xf32>
    tpu.vector_store %arg7[%c0_15, %c0_16], %32 {strides = array<i32>} : memref<2x1xf32, #tpu.memory_space<vmem>>, vector<2x1xf32>,
    %c0_i32_17 = arith.constant 0 : i32
    %34 = arith.cmpi eq, %arg1, %c0_i32_17 : i32
    %35 = arith.extui %34 : i1 to i32
    %c0_i32_18 = arith.constant 0 : i32
    %36 = arith.cmpi ne, %35, %c0_i32_18 : i32
    scf.if %36 {
      %c0_19 = arith.constant 0 : index
      %c0_20 = arith.constant 0 : index
      %37 = vector.load %arg6[%c0_19, %c0_20] : memref<2x1xf32, #tpu.memory_space<vmem>>, vector<2x1xf32>
      %c0_21 = arith.constant 0 : index
      %c0_22 = arith.constant 0 : index
      %c0_23 = arith.constant 0 : index
      %38 = vector.load %arg4[%c0_21, %c0_22, %c0_23] : memref<1x2x1xf32, #tpu.memory_space<vmem>>, vector<1x2x1xf32>
      %39 = vector.shape_cast %38 : vector<1x2x1xf32> to vector<2x1xf32>
      %40 = vector.shape_cast %37 : vector<2x1xf32> to vector<1x2x1xf32>
      tpu.vector_store %arg4[%c0_21, %c0_22, %c0_23], %40 {strides = array<i32>} : memref<1x2x1xf32, #tpu.memory_space<vmem>>, vector<1x2x1xf32>,
      %c0_24 = arith.constant 0 : index
      %c0_25 = arith.constant 0 : index
      %41 = vector.load %arg7[%c0_24, %c0_25] : memref<2x1xf32, #tpu.memory_space<vmem>>, vector<2x1xf32>
      %c0_26 = arith.constant 0 : index
      %c0_27 = arith.constant 0 : index
      %c0_28 = arith.constant 0 : index
      %42 = vector.load %arg5[%c0_26, %c0_27, %c0_28] : memref<1x2x1xf32, #tpu.memory_space<vmem>>, vector<1x2x1xf32>
      %43 = vector.shape_cast %42 : vector<1x2x1xf32> to vector<2x1xf32>
      %44 = vector.shape_cast %41 : vector<2x1xf32> to vector<1x2x1xf32>
      tpu.vector_store %arg5[%c0_26, %c0_27, %c0_28], %44 {strides = array<i32>} : memref<1x2x1xf32, #tpu.memory_space<vmem>>, vector<1x2x1xf32>,
    } else {
    }
    return
  }
  func.func @transform_0(%arg0: i32, %arg1: i32) -> (i32, i32) {
    %c1_i32 = arith.constant 1 : i32
    %0 = arith.muli %arg0, %c1_i32 : i32
    %1 = arith.addi %0, %arg1 : i32
    %c0_i32 = arith.constant 0 : i32
    %2 = arith.minsi %1, %c0_i32 : i32
    %c0_i32_0 = arith.constant 0 : i32
    %c0_i32_1 = arith.constant 0 : i32
    return %c0_i32_0, %2 : i32, i32
  }
  func.func @transform_1(%arg0: i32, %arg1: i32) -> (i32, i32) {
    %c1_i32 = arith.constant 1 : i32
    %0 = arith.muli %arg0, %c1_i32 : i32
    %1 = arith.addi %0, %arg1 : i32
    %c0_i32 = arith.constant 0 : i32
    %2 = arith.minsi %1, %c0_i32 : i32
    %c0_i32_0 = arith.constant 0 : i32
    %c0_i32_1 = arith.constant 0 : i32
    return %c0_i32_0, %2 : i32, i32
  }
  func.func @transform_2(%arg0: i32, %arg1: i32) -> (i32, i32, i32) {
    %c0_i32 = arith.constant 0 : i32
    %c0_i32_0 = arith.constant 0 : i32
    %c0_i32_1 = arith.constant 0 : i32
    return %arg0, %c0_i32, %c0_i32_0 : i32, i32, i32
  }
  func.func @transform_3(%arg0: i32, %arg1: i32) -> (i32, i32, i32) {
    %c0_i32 = arith.constant 0 : i32
    %c0_i32_0 = arith.constant 0 : i32
    %c0_i32_1 = arith.constant 0 : i32
    return %arg0, %c0_i32, %c0_i32_0 : i32, i32, i32
  }
}

</mosaic_0001>

<llo_original>
// kernel: tpu_custom_call.1
$region0: #{tpu_custom_call.1}
  #allocation0 [shape = 'u32[]', space=smem, size = 0x4, offset = 0x4, fixed_abs, tag = 'smem constant byte address 0x4 - core index']
  #allocation1 [shape = 'u32[72,128]{1,0:T(1,128)}', space=vmem, size = 0x9000, scoped, tag = 'internal scratch']
  #allocation2 [shape = 'f32[2,1]{1,0:T(2,128)}', space=vmem, size = 0x400, scoped, tag = 'scratch operand']
  #allocation3 [shape = 'f32[2,1]{1,0:T(2,128)}', space=vmem, size = 0x400, scoped, tag = 'scratch operand']
  %s0 = inlined_call_operand.hbm [shape: f32[2,1024], index: 0, kind: input, shape index: {}]
  %s1 = inlined_call_operand.hbm [shape: f32[2,1024], index: 1, kind: input, shape index: {}]
  %s2 = inlined_call_operand.vmem [shape: f32[1,2,1], index: 2, kind: output, shape index: {0}]
  %s3 = inlined_call_operand.vmem [shape: f32[1,2,1], index: 3, kind: output, shape index: {1}]
  %4 = xla_tuple %s2, %s3
  %s5 = sld [smem:[#allocation0]]
  $region42: #{tpu_custom_call.1} parent=0
    _
  %s7 = ssub.s32 1, %s5
  %s8 = scalar_select 0, %s7, %s5
  $region1: #{tpu_custom_call.1} parent=0
    #allocation4 [shape = 'u8[8192]{0}', space=vmem, size = 0x2000, scoped, tag = 'input window, operand 0, single buffered']
    #allocation5 [shape = 's32[1]{0}', space=sflag, size = 0x4, scoped, tag = 'scoped memory for tpu_custom_call.1']
    #allocation6 [shape = 'u8[8192]{0}', space=vmem, size = 0x2000, scoped, tag = 'input window, operand 1, single buffered']
    #allocation7 [shape = 's32[1]{0}', space=sflag, size = 0x4, scoped, tag = 'scoped memory for tpu_custom_call.1']
    %9 = vsyncpa [#allocation5], 0
    %10 = vsyncpa [#allocation7], 0
    // Predicated region
    $region2: #{tpu_custom_call.1} parent=1 // pred_check
      _
    $region3: #{tpu_custom_call.1} parent=1 // pred_check_branch
      %12 = sbr.rel (0) target = $region5
    $region4: #{tpu_custom_call.1} parent=1 // pred_region
      %s13 = sadd.s32 0, 0
      %p14 = scmp.lt.s32.totalorder %s13, 0
      %s15 = scalar_select %p14, %s13, 0
      %s16 = smul.u32 8, %s15
      %18 = vsyncadd [#allocation5], 0
      %s19 = smul.addr %s16, 2
      %s20 = scalar_lea.hbm %s0, %s19
      %s22 = sshll.u32 %s20, 4
      %s23 = int_to_ptr.hbm [resolvable:$true] %s22
      %s24 = sshll.u32 [#allocation4], 4
      %s25 = int_to_ptr.vmem [resolvable:$true] %s24
      %27 = dma.hbm_to_vmem [thread:$0]  %s23, 256, %s25, [#allocation5]
    $region5: #{tpu_custom_call.1} parent=1 // pred_fallthru
      _
    // Predicated region
    $region6: #{tpu_custom_call.1} parent=1 // pred_check
      _
    $region7: #{tpu_custom_call.1} parent=1 // pred_check_branch
      %29 = sbr.rel (0) target = $region9
    $region8: #{tpu_custom_call.1} parent=1 // pred_region
      %s30 = sadd.s32 0, 0
      %p31 = scmp.lt.s32.totalorder %s30, 0
      %s32 = scalar_select %p31, %s30, 0
      %s33 = smul.u32 8, %s32
      %35 = vsyncadd [#allocation7], 0
      %s36 = smul.addr %s33, 2
      %s37 = scalar_lea.hbm %s1, %s36
      %s39 = sshll.u32 %s37, 4
      %s40 = int_to_ptr.hbm [resolvable:$true] %s39
      %s41 = sshll.u32 [#allocation6], 4
      %s42 = int_to_ptr.vmem [resolvable:$true] %s41
      %44 = dma.hbm_to_vmem [thread:$0]  %s40, 256, %s42, [#allocation7]
    $region9: #{tpu_custom_call.1} parent=1 // pred_fallthru
      _
    // Predicated region
    $region10: #{tpu_custom_call.1} parent=1 // pred_check
      _
    $region11: #{tpu_custom_call.1} parent=1 // pred_check_branch
      %46 = sbr.rel (0) target = $region13
    $region12: #{tpu_custom_call.1} parent=1 // pred_region
      %48 = dma.done [#allocation5], 256
    $region13: #{tpu_custom_call.1} parent=1 // pred_fallthru
      _
    // Predicated region
    $region14: #{tpu_custom_call.1} parent=1 // pred_check
      _
    $region15: #{tpu_custom_call.1} parent=1 // pred_check_branch
      %50 = sbr.rel (0) target = $region17
    $region16: #{tpu_custom_call.1} parent=1 // pred_region
      %52 = dma.done [#allocation7], 256
    $region17: #{tpu_custom_call.1} parent=1 // pred_fallthru
      _
    %s53 = sadd.s32 0, 0
    %p54 = scmp.lt.s32.totalorder %s53, 0
    %s55 = scalar_select %p54, %s53, 0
    %s56 = smul.u32 8, %s55
    %s57 = sadd.s32 0, 0
    %p58 = scmp.lt.s32.totalorder %s57, 0
    %s59 = scalar_select %p58, %s57, 0
    %s60 = smul.u32 8, %s59
    %p61 = scmp.eq.s32.totalorder 0, 0
    // Predicated region
    $region18: #{tpu_custom_call.1} parent=1 // pred_check
      %p62 = pneg %p61
    $region19: #{tpu_custom_call.1} parent=1 // pred_check_branch
      %64 = sbr.rel (%p62) target = $region21
    $region20: #{tpu_custom_call.1} parent=1 // pred_region
      %vm65 = vcmask 1024
      %66 = vst.msk [vmem:[#allocation2] sm:$0x3] %vm65, 0.0
      %67 = vst.msk [vmem:[#allocation3] sm:$0x3] %vm65, 0.0
    $region21: #{tpu_custom_call.1} parent=1 // pred_fallthru
      _
    %s68 = sadd.s32 0, 0
    %s69 = smul.u32 %s68, 1024
    %v70 = vlaneseq
    %v71 = vand.u32 %v70, 127
    %v72 = vadd.s32 %v71, 128
    %v73 = vadd.s32 %v71, 256
    %v74 = vadd.s32 %v71, 384
    %v75 = vadd.s32 %v71, 512
    %v76 = vadd.s32 %v71, 640
    %v77 = vadd.s32 %v71, 768
    %v78 = vadd.s32 %v71, 896
    %v79 = vstv %s69
    %v80 = vadd.s32 %v79, %v71
    %v81 = vadd.s32 %v79, %v72
    %v82 = vadd.s32 %v79, %v73
    %v83 = vadd.s32 %v79, %v74
    %v84 = vadd.s32 %v79, %v75
    %v85 = vadd.s32 %v79, %v76
    %v86 = vadd.s32 %v79, %v77
    %v87 = vadd.s32 %v79, %v78
    %vm88 = vcmp.lt.s32.totalorder %v80, 1024
    %vm89 = vcmp.lt.s32.totalorder %v81, 1024
    %vm90 = vcmp.lt.s32.totalorder %v82, 1024
    %vm91 = vcmp.lt.s32.totalorder %v83, 1024
    %vm92 = vcmp.lt.s32.totalorder %v84, 1024
    %vm93 = vcmp.lt.s32.totalorder %v85, 1024
    %vm94 = vcmp.lt.s32.totalorder %v86, 1024
    %vm95 = vcmp.lt.s32.totalorder %v87, 1024
    %v96 = vld [vmem:[#allocation4] sm:$0xff]
    %v97 = vld [vmem:[#allocation4 + $0x8] sm:$0xff]
    %v98 = vxor.u32 %v96, 2147483648
    %v99 = vxor.u32 %v97, 2147483648
    %v100 = vmul.f32 %v98, 1.442695
    %v101 = vpow.pop %v100
    %v102 = vmul.f32 %v99, 1.442695
    %v103 = vpow.pop %v102
    %v104 = vadd.f32 %v101, 1.0
    %v105 = vadd.f32 %v103, 1.0
    %v106 = vrcp.pop %v104
    %v107 = vmul.f32 %v104, %v106
    %v108 = vsub.f32 1.0, %v107
    %v109 = vmul.f32 %v106, %v108
    %v110 = vadd.f32 %v106, %v109
    %vm111 = vweird.f32 %v104
    %vm112 = vweird.f32 %v106
    %vm113 = vmor %vm111, %vm112
    %v114 = vsel %vm113, %v106, %v110
    %v115 = vand.u32 2147483647, %v104
    %vm116 = vcmp.eq.f32.partialorder %v115, 8.507059e+37
    %v117 = vand.u32 %v104, 2147483648
    %v118 = vor.u32 1.1754944e-38, %v117
    %v119 = vsel %vm116, %v118, %v114
    %v120 = vmul.f32 1.0, %v119
    %v121 = vrcp.pop %v105
    %v122 = vmul.f32 %v105, %v121
    %v123 = vsub.f32 1.0, %v122
    %v124 = vmul.f32 %v121, %v123
    %v125 = vadd.f32 %v121, %v124
    %vm126 = vweird.f32 %v105
    %vm127 = vweird.f32 %v121
    %vm128 = vmor %vm126, %vm127
    %v129 = vsel %vm128, %v121, %v125
    %v130 = vand.u32 2147483647, %v105
    %vm131 = vcmp.eq.f32.partialorder %v130, 8.507059e+37
    %v132 = vand.u32 %v105, 2147483648
    %v133 = vor.u32 1.1754944e-38, %v132
    %v134 = vsel %vm131, %v133, %v129
    %v135 = vmul.f32 1.0, %v134
    %v136 = vld [vmem:[#allocation6] sm:$0xff]
    %v137 = vld [vmem:[#allocation6 + $0x8] sm:$0xff]
    %140 = vst [vmem:[#allocation1] ss:$4 sm:$0xff] %v120
    %s141 = scalar_lea.vmem [#allocation1], 32
    %142 = vst [vmem:[%s141] ss:$4 sm:$0xff] %v135
    %v143 = vld.sshfl [vmem:[#allocation1] sm:$0xff pattern:$0x73625140]
    %v144 = vld.sshfl [vmem:[#allocation1 + $0x8] sm:$0xff pattern:$0x73625140]
    %v145 = vld.sshfl [vmem:[#allocation1 + $0x10] sm:$0xff pattern:$0x73625140]
    %v146 = vld.sshfl [vmem:[#allocation1 + $0x18] sm:$0xff pattern:$0x73625140]
    %v147 = vld.sshfl [vmem:[#allocation1 + $0x20] sm:$0xff pattern:$0x73625140]
    %v148 = vld.sshfl [vmem:[#allocation1 + $0x28] sm:$0xff pattern:$0x73625140]
    %v149 = vld.sshfl [vmem:[#allocation1 + $0x30] sm:$0xff pattern:$0x73625140]
    %v150 = vld.sshfl [vmem:[#allocation1 + $0x38] sm:$0xff pattern:$0x73625140]
    %v159 = vsel %vm88, %v143, 0.0
    %v160 = vsel %vm89, %v144, 0.0
    %v161 = vsel %vm90, %v145, 0.0
    %v162 = vsel %vm91, %v146, 0.0
    %v163 = vsel %vm92, %v147, 0.0
    %v164 = vsel %vm93, %v148, 0.0
    %v165 = vsel %vm94, %v149, 0.0
    %v166 = vsel %vm95, %v150, 0.0
    %169 = vst [vmem:[#allocation1] ss:$4 sm:$0xff] %v136
    %s170 = scalar_lea.vmem [#allocation1], 32
    %171 = vst [vmem:[%s170] ss:$4 sm:$0xff] %v137
    %v172 = vld.sshfl [vmem:[#allocation1] sm:$0xff pattern:$0x73625140]
    %v173 = vld.sshfl [vmem:[#allocation1 + $0x8] sm:$0xff pattern:$0x73625140]
    %v174 = vld.sshfl [vmem:[#allocation1 + $0x10] sm:$0xff pattern:$0x73625140]
    %v175 = vld.sshfl [vmem:[#allocation1 + $0x18] sm:$0xff pattern:$0x73625140]
    %v176 = vld.sshfl [vmem:[#allocation1 + $0x20] sm:$0xff pattern:$0x73625140]
    %v177 = vld.sshfl [vmem:[#allocation1 + $0x28] sm:$0xff pattern:$0x73625140]
    %v178 = vld.sshfl [vmem:[#allocation1 + $0x30] sm:$0xff pattern:$0x73625140]
    %v179 = vld.sshfl [vmem:[#allocation1 + $0x38] sm:$0xff pattern:$0x73625140]
    %v188 = vsel %vm88, %v172, 0.0
    %v189 = vsel %vm89, %v173, 0.0
    %v190 = vsel %vm90, %v174, 0.0
    %v191 = vsel %vm91, %v175, 0.0
    %v192 = vsel %vm92, %v176, 0.0
    %v193 = vsel %vm93, %v177, 0.0
    %v194 = vsel %vm94, %v178, 0.0
    %v195 = vsel %vm95, %v179, 0.0
    %v196 = vld [vmem:[#allocation2] sm:$0x3]
    %v197 = vmul.f32 %v159, %v188
    %v198 = vmul.f32 %v160, %v189
    %v199 = vmul.f32 %v161, %v190
    %v200 = vmul.f32 %v162, %v191
    %v201 = vmul.f32 %v163, %v192
    %v202 = vmul.f32 %v164, %v193
    %v203 = vmul.f32 %v165, %v194
    %v204 = vmul.f32 %v166, %v195
    %vm205 = vcmask 1041408
    %v206 = vsel %vm205, %v197, 0.0
    %v207 = vsel %vm205, %v198, 0.0
    %v208 = vadd.f32 %v206, %v207
    %v209 = vsel %vm205, %v199, 0.0
    %v210 = vadd.f32 %v208, %v209
    %v211 = vsel %vm205, %v200, 0.0
    %v212 = vadd.f32 %v210, %v211
    %v213 = vsel %vm205, %v201, 0.0
    %v214 = vadd.f32 %v212, %v213
    %v215 = vsel %vm205, %v202, 0.0
    %v216 = vadd.f32 %v214, %v215
    %v217 = vsel %vm205, %v203, 0.0
    %v218 = vadd.f32 %v216, %v217
    %v219 = vsel %vm205, %v204, 0.0
    %v220 = vadd.f32 %v218, %v219
    %221 = vadd.xlane.f32.xlu0 %v220
    %v222 = vpop.xlane.xlu0 %221
    %v223 = vadd.f32 %v196, %v222
    %vm224 = vcmask 1024
    %225 = vst.msk [vmem:[#allocation2] sm:$0x3] %vm224, %v223
    %v226 = vld [vmem:[#allocation3] sm:$0x3]
    %v227 = vadd.f32 %v159, %v188
    %v228 = vadd.f32 %v160, %v189
    %v229 = vadd.f32 %v161, %v190
    %v230 = vadd.f32 %v162, %v191
    %v231 = vadd.f32 %v163, %v192
    %v232 = vadd.f32 %v164, %v193
    %v233 = vadd.f32 %v165, %v194
    %v234 = vadd.f32 %v166, %v195
    %v235 = vsel %vm205, %v227, 0.0
    %v236 = vsel %vm205, %v228, 0.0
    %v237 = vadd.f32 %v235, %v236
    %v238 = vsel %vm205, %v229, 0.0
    %v239 = vadd.f32 %v237, %v238
    %v240 = vsel %vm205, %v230, 0.0
    %v241 = vadd.f32 %v239, %v240
    %v242 = vsel %vm205, %v231, 0.0
    %v243 = vadd.f32 %v241, %v242
    %v244 = vsel %vm205, %v232, 0.0
    %v245 = vadd.f32 %v243, %v244
    %v246 = vsel %vm205, %v233, 0.0
    %v247 = vadd.f32 %v245, %v246
    %v248 = vsel %vm205, %v234, 0.0
    %v249 = vadd.f32 %v247, %v248
    %250 = vadd.xlane.f32.xlu0 %v249
    %v251 = vpop.xlane.xlu0 %250
    %v252 = vadd.f32 %v226, %v251
    %253 = vst.msk [vmem:[#allocation3] sm:$0x3] %vm224, %v252
    // Predicated region
    $region22: #{tpu_custom_call.1} parent=1 // pred_check
      %p254 = pneg %p61
    $region23: #{tpu_custom_call.1} parent=1 // pred_check_branch
      %256 = sbr.rel (%p254) target = $region25
    $region24: #{tpu_custom_call.1} parent=1 // pred_region
      %v257 = vld [vmem:[#allocation2] sm:$0x3]
      %258 = vst.msk [vmem:[%s2] sm:$0x3] %vm224, %v257
      %v259 = vld [vmem:[#allocation3] sm:$0x3]
      %260 = vst.msk [vmem:[%s3] sm:$0x3] %vm224, %v259
    $region25: #{tpu_custom_call.1} parent=1 // pred_fallthru
      _
    // Predicated region
    $region26: #{tpu_custom_call.1} parent=1 // pred_check
      _
    $region27: #{tpu_custom_call.1} parent=1 // pred_check_branch
      %262 = sbr.rel (0) target = $region29
    $region28: #{tpu_custom_call.1} parent=1 // pred_region
      _
    $region29: #{tpu_custom_call.1} parent=1 // pred_fallthru
      _
    // Predicated region
    $region30: #{tpu_custom_call.1} parent=1 // pred_check
      _
    $region31: #{tpu_custom_call.1} parent=1 // pred_check_branch
      %264 = sbr.rel (0) target = $region33
    $region32: #{tpu_custom_call.1} parent=1 // pred_region
      _
    $region33: #{tpu_custom_call.1} parent=1 // pred_fallthru
      _
    // Predicated region
    $region34: #{tpu_custom_call.1} parent=1 // pred_check
      _
    $region35: #{tpu_custom_call.1} parent=1 // pred_check_branch
      %266 = sbr.rel (0) target = $region37
    $region36: #{tpu_custom_call.1} parent=1 // pred_region
      _
    $region37: #{tpu_custom_call.1} parent=1 // pred_fallthru
      _
    // Predicated region
    $region38: #{tpu_custom_call.1} parent=1 // pred_check
      _
    $region39: #{tpu_custom_call.1} parent=1 // pred_check_branch
      %268 = sbr.rel (0) target = $region41
    $region40: #{tpu_custom_call.1} parent=1 // pred_region
      _
    $region41: #{tpu_custom_call.1} parent=1 // pred_fallthru
      _
    %269 = vsyncpa [#allocation5], 1
    %270 = vsyncpa [#allocation7], 1

</llo_original>
